<compile_context>
chip_gen: v6e
topology: v6e:2x2x1
jax: 0.10.0
libtpu: 0.0.40
codegen_flags: <defaults>
</compile_context>

<pallas_src>
import jax
import jax.numpy as jnp
from jax.experimental import pallas as pl
from jax.experimental.pallas import tpu as pltpu


_LANE = 128
_VMEM_TILE_BUDGET = 24 * 1024 * 1024   # double-buffered x/w/out blocks per step
_VMEM_LIMIT = 48 * 1024 * 1024         # scoped VMEM limit (< v7x's 64 MiB physical)
_MAX_TM = 1024                         # mode-tile lane cap (review: 512-2048 ideal)


def _spectral_mix_kernel(x_ref, w_ref, o_ref):
    """One (M-tile, B-tile) grid step of the complex per-mode channel mixing.

    x_ref: (Cin, 2, TB, TM)     activations  ([:,0] real, [:,1] imag)
    w_ref: (Cin, 2, Cout, TM)   weights      (reused across B tiles)
    o_ref: (2, TB, Cout, TM)    output
    """
    cin = x_ref.shape[0]
    tb = x_ref.shape[2]
    tm = x_ref.shape[3]
    cout = w_ref.shape[2]

    # Produce the output in Cout chunks of <=8 sublane rows so each chunk's
    # f32 accumulators stay vreg-sized instead of spilling to VMEM.
    oc = 8 if (cout > 8 and cout % 8 == 0) else cout

    for oc0 in range(0, cout, oc):

        def mac(i, carry, oc0=oc0):
            acc_r, acc_i = carry
            x_i = x_ref[i]                             # (2, TB, TM)
            w_i = w_ref[i, :, oc0:oc0 + oc, :]         # (2, oc, TM)
            xr = x_i[0][:, None, :]                    # (TB, 1, TM)
            xi = x_i[1][:, None, :]
            wr = w_i[0][None, :, :]                    # (1, oc, TM)
            wi = w_i[1][None, :, :]
            acc_r = acc_r + xr * wr - xi * wi
            acc_i = acc_i + xr * wi + xi * wr
            return acc_r, acc_i

        acc = (jnp.zeros((tb, oc, tm), jnp.float32),
               jnp.zeros((tb, oc, tm), jnp.float32))

        if cin <= 8:
            # Fully static unroll (static indices) for tiny Cin.
            for i in range(cin):
                acc = mac(i, acc)
        else:
            # Bounded live ranges for large Cin: fori_loop with a modest unroll.
            unroll = next(u for u in (8, 4, 2, 1) if cin % u == 0)
            acc = jax.lax.fori_loop(0, cin, mac, acc, unroll=unroll)

        acc_r, acc_i = acc
        o_ref[0, :, oc0:oc0 + oc, :] = acc_r
        o_ref[1, :, oc0:oc0 + oc, :] = acc_i


def _pick_tiles(batch, cin, cout, m_pad):
    """Choose (TB, TM) so double-buffered x/w/out blocks fit the VMEM budget."""
    # Batch tile: B is the inner grid axis so the weight tile is reused across it.
    if batch > 8 and batch % 8 == 0:
        tb = 8
    else:
        tb = batch
    # f32 bytes per lane of TM for the double-buffered x, w and out blocks.
    per_lane = 2 * 4 * 2 * (tb * cin + cin * cout + tb * cout)
    cap = max(_LANE, (_VMEM_TILE_BUDGET // per_lane) // _LANE * _LANE)
    tm = min(m_pad, _MAX_TM, cap)
    tm = max(_LANE, (tm // _LANE) * _LANE)
    while m_pad % tm:          # m_pad is a multiple of 128, so this terminates
        tm -= _LANE
    return tb, tm


def spectral_mix_pallas(x_ri, w_ri):
    """out[:,b,o,m] = complex sum_i x[i,:,b,m] * w[i,:,o,m]  (real/imag packed).

    x_ri: f32 (Cin, 2, B, M)      M a multiple of 128
    w_ri: f32 (Cin, 2, Cout, M)
    returns f32 (2, B, Cout, M)
    """
    cin, _, batch, m = x_ri.shape
    cout = w_ri.shape[2]
    tb, tm = _pick_tiles(batch, cin, cout, m)

    grid = (m // tm, batch // tb)   # M outer, B inner -> weight reuse across B
    grid_spec = pltpu.PrefetchScalarGridSpec(
        num_scalar_prefetch=0,
        grid=grid,
        in_specs=[
            pl.BlockSpec((cin, 2, tb, tm), lambda mi, bi: (0, 0, bi, mi)),
            # Weight index_map depends only on the M tile: no re-DMA across B tiles.
            pl.BlockSpec((cin, 2, cout, tm), lambda mi, bi: (0, 0, 0, mi)),
        ],
        out_specs=pl.BlockSpec((2, tb, cout, tm), lambda mi, bi: (0, bi, 0, mi)),
    )

    return pl.pallas_call(
        _spectral_mix_kernel,
        out_shape=jax.ShapeDtypeStruct((2, batch, cout, m), jnp.float32),
        grid_spec=grid_spec,
        compiler_params=pltpu.CompilerParams(
            dimension_semantics=("parallel", "parallel"),
            vmem_limit_bytes=_VMEM_LIMIT,
        ),
    )(x_ri, w_ri)


class SpectralConv2dFast:
    """JAX/Pallas port of SpectralConv2d_fast (deterministic synthetic weights)."""

    def __init__(self, in_channels, out_channels, modes1, modes2, key):
        self.in_channels = in_channels
        self.out_channels = out_channels
        self.modes1 = modes1
        self.modes2 = modes2
        scale = 1.0 / (in_channels * out_channels)
        k1, k2, k3, k4 = jax.random.split(key, 4)
        shp = (in_channels, out_channels, modes1, modes2)
        # torch.rand(..., dtype=cfloat) draws uniform [0,1) real and imaginary parts.
        self.weights1 = (scale * (jax.random.uniform(k1, shp, jnp.float32)
                                  + 1j * jax.random.uniform(k2, shp, jnp.float32))
                         ).astype(jnp.complex64)
        self.weights2 = (scale * (jax.random.uniform(k3, shp, jnp.float32)
                                  + 1j * jax.random.uniform(k4, shp, jnp.float32))
                         ).astype(jnp.complex64)

        # Hoisted weight re-layout (once, not per forward): bands fused along the
        # mode axis, modes flattened onto the lane axis and zero-padded to x128,
        # real/imag packed, Cin leading for cheap in-kernel dynamic indexing.
        self.m_tot = 2 * modes1 * modes2
        self.m_pad = ((self.m_tot + _LANE - 1) // _LANE) * _LANE
        w_cat = jnp.concatenate([self.weights1, self.weights2], axis=2)
        w_cat = w_cat.reshape(in_channels, out_channels, self.m_tot)
        w_ri = jnp.stack([jnp.real(w_cat), jnp.imag(w_cat)], axis=1)   # (Cin,2,Cout,m_tot)
        if self.m_pad != self.m_tot:
            w_ri = jnp.pad(w_ri, ((0, 0), (0, 0), (0, 0), (0, self.m_pad - self.m_tot)))
        self.w_ri = w_ri.astype(jnp.float32)                           # (Cin,2,Cout,M_pad)

    def __call__(self, x):
        # x: float32 NCHW (B, Cin, H, W)
        batch, cin, h, w = x.shape
        assert cin == self.in_channels
        m1, m2 = self.modes1, self.modes2
        wf = w // 2 + 1
        assert h >= 2 * m1 and wf >= m2, "spatial size too small for requested modes"

        # TODO(synk): rfft2 / irfft2 have no Pallas TPU primitive; kept in plain JAX.
        x_ft = jnp.fft.rfft2(x)                                        # (B,Cin,H,Wf) c64

        # Fuse low band (rows :m1) and high band (rows H-m1:) onto one flat mode
        # axis, Cin leading, real/imag packed, lane-padded to M_pad.
        x_modes = jnp.concatenate(
            [x_ft[:, :, :m1, :m2], x_ft[:, :, h - m1:, :m2]], axis=2
        ).reshape(batch, cin, self.m_tot).transpose(1, 0, 2)           # (Cin, B, m_tot)
        x_ri = jnp.stack([jnp.real(x_modes), jnp.imag(x_modes)], axis=1)  # (Cin,2,B,m_tot)
        if self.m_pad != self.m_tot:
            x_ri = jnp.pad(x_ri, ((0, 0), (0, 0), (0, 0), (0, self.m_pad - self.m_tot)))
        x_ri = x_ri.astype(jnp.float32)

        out_ri = spectral_mix_pallas(x_ri, self.w_ri)                  # (2, B, Cout, M_pad)

        out = out_ri[0, :, :, :self.m_tot] + 1j * out_ri[1, :, :, :self.m_tot]
        out = out.astype(jnp.complex64).reshape(batch, self.out_channels, 2 * m1, m2)

        out_ft = jnp.zeros((batch, self.out_channels, h, wf), dtype=jnp.complex64)
        out_ft = out_ft.at[:, :, :m1, :m2].set(out[:, :, :m1, :])
        out_ft = out_ft.at[:, :, h - m1:, :m2].set(out[:, :, m1:, :])

        return jnp.fft.irfft2(out_ft, s=(h, w))                        # f32 (B,Cout,H,W)


def _check(key, *, batch, cin, cout, m1, m2, h, w):
    kw, kx = jax.random.split(key)
    layer = SpectralConv2dFast(cin, cout, m1, m2, kw)
    x = jax.random.normal(kx, (batch, cin, h, w), dtype=jnp.float32)

    y = jax.block_until_ready(layer(x))
    assert y.shape == (batch, cout, h, w) and y.dtype == jnp.float32

    # Pure-JAX reference for the full forward pass (einsum instead of Pallas).
    x_ft = jnp.fft.rfft2(x)
    out_ft = jnp.zeros((batch, cout, h, w // 2 + 1), dtype=jnp.complex64)
    out_ft = out_ft.at[:, :, :m1, :m2].set(
        jnp.einsum('bixy,ioxy->boxy', x_ft[:, :, :m1, :m2], layer.weights1))
    out_ft = out_ft.at[:, :, h - m1:, :m2].set(
        jnp.einsum('bixy,ioxy->boxy', x_ft[:, :, h - m1:, :m2], layer.weights2))
    y_ref = jnp.fft.irfft2(out_ft, s=(h, w))

    err = jnp.max(jnp.abs(y - y_ref))
    assert jnp.allclose(y, y_ref, atol=1e-4, rtol=1e-4), f"max abs err {err}"


if __name__ == "__main__":
    key = jax.random.PRNGKey(0)
    k1, k2 = jax.random.split(key)

    # Small config (matches the module's intended scale): single grid step.
    _check(k1, batch=2, cin=4, cout=4, m1=4, m2=4, h=16, w=16)

    # Config that exercises M tiling (3 mode tiles), lane padding (1104->1152),
    # the Cout chunking path and the fori_loop Cin path.
    _check(k2, batch=2, cin=12, cout=16, m1=24, m2=23, h=48, w=48)

    print("KERNEL_OK")
</pallas_src>

<mosaic_0001>
module attributes {stable_mosaic.version = 11 : i64} {
  func.func @_spectral_mix_kernel(%arg0: i32, %arg1: i32, %arg2: memref<4x2x2x128xf32, #tpu.memory_space<vmem>>, %arg3: memref<4x2x4x128xf32, #tpu.memory_space<vmem>>, %arg4: memref<2x2x4x128xf32, #tpu.memory_space<vmem>>) attributes {dimension_semantics = [#tpu.dimension_semantics<parallel>, #tpu.dimension_semantics<parallel>], iteration_bounds = array<i64: 1, 1>, scalar_prefetch = 0 : i64, scratch_operands = 0 : i64, tpu.core_type = #tpu.core_type<tc>, window_params = [{transform_indices = @transform_0, window_bounds = array<i64: 4, 2, 2, 128>}, {transform_indices = @transform_1, window_bounds = array<i64: 4, 2, 4, 128>}, {transform_indices = @transform_2, window_bounds = array<i64: 2, 2, 4, 128>}]} {
    %cst = arith.constant 0.000000e+00 : f32
    %0 = vector.broadcast %cst : f32 to vector<2x4x128xf32>
    %cst_0 = arith.constant 0.000000e+00 : f32
    %1 = vector.broadcast %cst_0 : f32 to vector<2x4x128xf32>
    %c0 = arith.constant 0 : index
    %c0_1 = arith.constant 0 : index
    %c0_2 = arith.constant 0 : index
    %c0_3 = arith.constant 0 : index
    %2 = vector.load %arg2[%c0, %c0_1, %c0_2, %c0_3] : memref<4x2x2x128xf32, #tpu.memory_space<vmem>>, vector<1x2x2x128xf32>
    %3 = vector.shape_cast %2 : vector<1x2x2x128xf32> to vector<2x2x128xf32>
    %c0_4 = arith.constant 0 : index
    %c0_5 = arith.constant 0 : index
    %c0_6 = arith.constant 0 : index
    %c0_7 = arith.constant 0 : index
    %4 = vector.load %arg3[%c0_4, %c0_5, %c0_6, %c0_7] : memref<4x2x4x128xf32, #tpu.memory_space<vmem>>, vector<1x2x4x128xf32>
    %5 = vector.shape_cast %4 : vector<1x2x4x128xf32> to vector<2x4x128xf32>
    %6 = vector.extract_strided_slice %3 {offsets = [0, 0, 0], sizes = [1, 2, 128], strides = [1, 1, 1]} : vector<2x2x128xf32> to vector<1x2x128xf32>
    %7 = vector.shape_cast %6 : vector<1x2x128xf32> to vector<2x128xf32>
    %8 = vector.shape_cast %7 : vector<2x128xf32> to vector<2x1x128xf32>
    %9 = vector.extract_strided_slice %3 {offsets = [1, 0, 0], sizes = [1, 2, 128], strides = [1, 1, 1]} : vector<2x2x128xf32> to vector<1x2x128xf32>
    %10 = vector.shape_cast %9 : vector<1x2x128xf32> to vector<2x128xf32>
    %11 = vector.shape_cast %10 : vector<2x128xf32> to vector<2x1x128xf32>
    %12 = vector.extract_strided_slice %5 {offsets = [0, 0, 0], sizes = [1, 4, 128], strides = [1, 1, 1]} : vector<2x4x128xf32> to vector<1x4x128xf32>
    %13 = vector.shape_cast %12 : vector<1x4x128xf32> to vector<4x128xf32>
    %14 = vector.shape_cast %13 : vector<4x128xf32> to vector<1x4x128xf32>
    %15 = vector.extract_strided_slice %5 {offsets = [1, 0, 0], sizes = [1, 4, 128], strides = [1, 1, 1]} : vector<2x4x128xf32> to vector<1x4x128xf32>
    %16 = vector.shape_cast %15 : vector<1x4x128xf32> to vector<4x128xf32>
    %17 = vector.shape_cast %16 : vector<4x128xf32> to vector<1x4x128xf32>
    %18 = vector.broadcast %8 : vector<2x1x128xf32> to vector<2x4x128xf32>
    %19 = vector.broadcast %14 : vector<1x4x128xf32> to vector<2x4x128xf32>
    %20 = arith.mulf %18, %19 : vector<2x4x128xf32>
    %21 = arith.addf %0, %20 : vector<2x4x128xf32>
    %22 = vector.broadcast %11 : vector<2x1x128xf32> to vector<2x4x128xf32>
    %23 = vector.broadcast %17 : vector<1x4x128xf32> to vector<2x4x128xf32>
    %24 = arith.mulf %22, %23 : vector<2x4x128xf32>
    %25 = arith.subf %21, %24 : vector<2x4x128xf32>
    %26 = vector.broadcast %8 : vector<2x1x128xf32> to vector<2x4x128xf32>
    %27 = vector.broadcast %17 : vector<1x4x128xf32> to vector<2x4x128xf32>
    %28 = arith.mulf %26, %27 : vector<2x4x128xf32>
    %29 = arith.addf %1, %28 : vector<2x4x128xf32>
    %30 = vector.broadcast %11 : vector<2x1x128xf32> to vector<2x4x128xf32>
    %31 = vector.broadcast %14 : vector<1x4x128xf32> to vector<2x4x128xf32>
    %32 = arith.mulf %30, %31 : vector<2x4x128xf32>
    %33 = arith.addf %29, %32 : vector<2x4x128xf32>
    %c1 = arith.constant 1 : index
    %c0_8 = arith.constant 0 : index
    %c0_9 = arith.constant 0 : index
    %c0_10 = arith.constant 0 : index
    %34 = vector.load %arg2[%c1, %c0_8, %c0_9, %c0_10] : memref<4x2x2x128xf32, #tpu.memory_space<vmem>>, vector<1x2x2x128xf32>
    %35 = vector.shape_cast %34 : vector<1x2x2x128xf32> to vector<2x2x128xf32>
    %c1_11 = arith.constant 1 : index
    %c0_12 = arith.constant 0 : index
    %c0_13 = arith.constant 0 : index
    %c0_14 = arith.constant 0 : index
    %36 = vector.load %arg3[%c1_11, %c0_12, %c0_13, %c0_14] : memref<4x2x4x128xf32, #tpu.memory_space<vmem>>, vector<1x2x4x128xf32>
    %37 = vector.shape_cast %36 : vector<1x2x4x128xf32> to vector<2x4x128xf32>
    %38 = vector.extract_strided_slice %35 {offsets = [0, 0, 0], sizes = [1, 2, 128], strides = [1, 1, 1]} : vector<2x2x128xf32> to vector<1x2x128xf32>
    %39 = vector.shape_cast %38 : vector<1x2x128xf32> to vector<2x128xf32>
    %40 = vector.shape_cast %39 : vector<2x128xf32> to vector<2x1x128xf32>
    %41 = vector.extract_strided_slice %35 {offsets = [1, 0, 0], sizes = [1, 2, 128], strides = [1, 1, 1]} : vector<2x2x128xf32> to vector<1x2x128xf32>
    %42 = vector.shape_cast %41 : vector<1x2x128xf32> to vector<2x128xf32>
    %43 = vector.shape_cast %42 : vector<2x128xf32> to vector<2x1x128xf32>
    %44 = vector.extract_strided_slice %37 {offsets = [0, 0, 0], sizes = [1, 4, 128], strides = [1, 1, 1]} : vector<2x4x128xf32> to vector<1x4x128xf32>
    %45 = vector.shape_cast %44 : vector<1x4x128xf32> to vector<4x128xf32>
    %46 = vector.shape_cast %45 : vector<4x128xf32> to vector<1x4x128xf32>
    %47 = vector.extract_strided_slice %37 {offsets = [1, 0, 0], sizes = [1, 4, 128], strides = [1, 1, 1]} : vector<2x4x128xf32> to vector<1x4x128xf32>
    %48 = vector.shape_cast %47 : vector<1x4x128xf32> to vector<4x128xf32>
    %49 = vector.shape_cast %48 : vector<4x128xf32> to vector<1x4x128xf32>
    %50 = vector.broadcast %40 : vector<2x1x128xf32> to vector<2x4x128xf32>
    %51 = vector.broadcast %46 : vector<1x4x128xf32> to vector<2x4x128xf32>
    %52 = arith.mulf %50, %51 : vector<2x4x128xf32>
    %53 = arith.addf %25, %52 : vector<2x4x128xf32>
    %54 = vector.broadcast %43 : vector<2x1x128xf32> to vector<2x4x128xf32>
    %55 = vector.broadcast %49 : vector<1x4x128xf32> to vector<2x4x128xf32>
    %56 = arith.mulf %54, %55 : vector<2x4x128xf32>
    %57 = arith.subf %53, %56 : vector<2x4x128xf32>
    %58 = vector.broadcast %40 : vector<2x1x128xf32> to vector<2x4x128xf32>
    %59 = vector.broadcast %49 : vector<1x4x128xf32> to vector<2x4x128xf32>
    %60 = arith.mulf %58, %59 : vector<2x4x128xf32>
    %61 = arith.addf %33, %60 : vector<2x4x128xf32>
    %62 = vector.broadcast %43 : vector<2x1x128xf32> to vector<2x4x128xf32>
    %63 = vector.broadcast %46 : vector<1x4x128xf32> to vector<2x4x128xf32>
    %64 = arith.mulf %62, %63 : vector<2x4x128xf32>
    %65 = arith.addf %61, %64 : vector<2x4x128xf32>
    %c2 = arith.constant 2 : index
    %c0_15 = arith.constant 0 : index
    %c0_16 = arith.constant 0 : index
    %c0_17 = arith.constant 0 : index
    %66 = vector.load %arg2[%c2, %c0_15, %c0_16, %c0_17] : memref<4x2x2x128xf32, #tpu.memory_space<vmem>>, vector<1x2x2x128xf32>
    %67 = vector.shape_cast %66 : vector<1x2x2x128xf32> to vector<2x2x128xf32>
    %c2_18 = arith.constant 2 : index
    %c0_19 = arith.constant 0 : index
    %c0_20 = arith.constant 0 : index
    %c0_21 = arith.constant 0 : index
    %68 = vector.load %arg3[%c2_18, %c0_19, %c0_20, %c0_21] : memref<4x2x4x128xf32, #tpu.memory_space<vmem>>, vector<1x2x4x128xf32>
    %69 = vector.shape_cast %68 : vector<1x2x4x128xf32> to vector<2x4x128xf32>
    %70 = vector.extract_strided_slice %67 {offsets = [0, 0, 0], sizes = [1, 2, 128], strides = [1, 1, 1]} : vector<2x2x128xf32> to vector<1x2x128xf32>
    %71 = vector.shape_cast %70 : vector<1x2x128xf32> to vector<2x128xf32>
    %72 = vector.shape_cast %71 : vector<2x128xf32> to vector<2x1x128xf32>
    %73 = vector.extract_strided_slice %67 {offsets = [1, 0, 0], sizes = [1, 2, 128], strides = [1, 1, 1]} : vector<2x2x128xf32> to vector<1x2x128xf32>
    %74 = vector.shape_cast %73 : vector<1x2x128xf32> to vector<2x128xf32>
    %75 = vector.shape_cast %74 : vector<2x128xf32> to vector<2x1x128xf32>
    %76 = vector.extract_strided_slice %69 {offsets = [0, 0, 0], sizes = [1, 4, 128], strides = [1, 1, 1]} : vector<2x4x128xf32> to vector<1x4x128xf32>
    %77 = vector.shape_cast %76 : vector<1x4x128xf32> to vector<4x128xf32>
    %78 = vector.shape_cast %77 : vector<4x128xf32> to vector<1x4x128xf32>
    %79 = vector.extract_strided_slice %69 {offsets = [1, 0, 0], sizes = [1, 4, 128], strides = [1, 1, 1]} : vector<2x4x128xf32> to vector<1x4x128xf32>
    %80 = vector.shape_cast %79 : vector<1x4x128xf32> to vector<4x128xf32>
    %81 = vector.shape_cast %80 : vector<4x128xf32> to vector<1x4x128xf32>
    %82 = vector.broadcast %72 : vector<2x1x128xf32> to vector<2x4x128xf32>
    %83 = vector.broadcast %78 : vector<1x4x128xf32> to vector<2x4x128xf32>
    %84 = arith.mulf %82, %83 : vector<2x4x128xf32>
    %85 = arith.addf %57, %84 : vector<2x4x128xf32>
    %86 = vector.broadcast %75 : vector<2x1x128xf32> to vector<2x4x128xf32>
    %87 = vector.broadcast %81 : vector<1x4x128xf32> to vector<2x4x128xf32>
    %88 = arith.mulf %86, %87 : vector<2x4x128xf32>
    %89 = arith.subf %85, %88 : vector<2x4x128xf32>
    %90 = vector.broadcast %72 : vector<2x1x128xf32> to vector<2x4x128xf32>
    %91 = vector.broadcast %81 : vector<1x4x128xf32> to vector<2x4x128xf32>
    %92 = arith.mulf %90, %91 : vector<2x4x128xf32>
    %93 = arith.addf %65, %92 : vector<2x4x128xf32>
    %94 = vector.broadcast %75 : vector<2x1x128xf32> to vector<2x4x128xf32>
    %95 = vector.broadcast %78 : vector<1x4x128xf32> to vector<2x4x128xf32>
    %96 = arith.mulf %94, %95 : vector<2x4x128xf32>
    %97 = arith.addf %93, %96 : vector<2x4x128xf32>
    %c3 = arith.constant 3 : index
    %c0_22 = arith.constant 0 : index
    %c0_23 = arith.constant 0 : index
    %c0_24 = arith.constant 0 : index
    %98 = vector.load %arg2[%c3, %c0_22, %c0_23, %c0_24] : memref<4x2x2x128xf32, #tpu.memory_space<vmem>>, vector<1x2x2x128xf32>
    %99 = vector.shape_cast %98 : vector<1x2x2x128xf32> to vector<2x2x128xf32>
    %c3_25 = arith.constant 3 : index
    %c0_26 = arith.constant 0 : index
    %c0_27 = arith.constant 0 : index
    %c0_28 = arith.constant 0 : index
    %100 = vector.load %arg3[%c3_25, %c0_26, %c0_27, %c0_28] : memref<4x2x4x128xf32, #tpu.memory_space<vmem>>, vector<1x2x4x128xf32>
    %101 = vector.shape_cast %100 : vector<1x2x4x128xf32> to vector<2x4x128xf32>
    %102 = vector.extract_strided_slice %99 {offsets = [0, 0, 0], sizes = [1, 2, 128], strides = [1, 1, 1]} : vector<2x2x128xf32> to vector<1x2x128xf32>
    %103 = vector.shape_cast %102 : vector<1x2x128xf32> to vector<2x128xf32>
    %104 = vector.shape_cast %103 : vector<2x128xf32> to vector<2x1x128xf32>
    %105 = vector.extract_strided_slice %99 {offsets = [1, 0, 0], sizes = [1, 2, 128], strides = [1, 1, 1]} : vector<2x2x128xf32> to vector<1x2x128xf32>
    %106 = vector.shape_cast %105 : vector<1x2x128xf32> to vector<2x128xf32>
    %107 = vector.shape_cast %106 : vector<2x128xf32> to vector<2x1x128xf32>
    %108 = vector.extract_strided_slice %101 {offsets = [0, 0, 0], sizes = [1, 4, 128], strides = [1, 1, 1]} : vector<2x4x128xf32> to vector<1x4x128xf32>
    %109 = vector.shape_cast %108 : vector<1x4x128xf32> to vector<4x128xf32>
    %110 = vector.shape_cast %109 : vector<4x128xf32> to vector<1x4x128xf32>
    %111 = vector.extract_strided_slice %101 {offsets = [1, 0, 0], sizes = [1, 4, 128], strides = [1, 1, 1]} : vector<2x4x128xf32> to vector<1x4x128xf32>
    %112 = vector.shape_cast %111 : vector<1x4x128xf32> to vector<4x128xf32>
    %113 = vector.shape_cast %112 : vector<4x128xf32> to vector<1x4x128xf32>
    %114 = vector.broadcast %104 : vector<2x1x128xf32> to vector<2x4x128xf32>
    %115 = vector.broadcast %110 : vector<1x4x128xf32> to vector<2x4x128xf32>
    %116 = arith.mulf %114, %115 : vector<2x4x128xf32>
    %117 = arith.addf %89, %116 : vector<2x4x128xf32>
    %118 = vector.broadcast %107 : vector<2x1x128xf32> to vector<2x4x128xf32>
    %119 = vector.broadcast %113 : vector<1x4x128xf32> to vector<2x4x128xf32>
    %120 = arith.mulf %118, %119 : vector<2x4x128xf32>
    %121 = arith.subf %117, %120 : vector<2x4x128xf32>
    %122 = vector.broadcast %104 : vector<2x1x128xf32> to vector<2x4x128xf32>
    %123 = vector.broadcast %113 : vector<1x4x128xf32> to vector<2x4x128xf32>
    %124 = arith.mulf %122, %123 : vector<2x4x128xf32>
    %125 = arith.addf %97, %124 : vector<2x4x128xf32>
    %126 = vector.broadcast %107 : vector<2x1x128xf32> to vector<2x4x128xf32>
    %127 = vector.broadcast %110 : vector<1x4x128xf32> to vector<2x4x128xf32>
    %128 = arith.mulf %126, %127 : vector<2x4x128xf32>
    %129 = arith.addf %125, %128 : vector<2x4x128xf32>
    %c0_29 = arith.constant 0 : index
    %c0_30 = arith.constant 0 : index
    %c0_31 = arith.constant 0 : index
    %c0_32 = arith.constant 0 : index
    %130 = vector.load %arg4[%c0_29, %c0_30, %c0_31, %c0_32] : memref<2x2x4x128xf32, #tpu.memory_space<vmem>>, vector<1x2x4x128xf32>
    %131 = vector.shape_cast %130 : vector<1x2x4x128xf32> to vector<2x4x128xf32>
    %132 = vector.shape_cast %121 : vector<2x4x128xf32> to vector<1x2x4x128xf32>
    tpu.vector_store %arg4[%c0_29, %c0_30, %c0_31, %c0_32], %132 {strides = array<i32>} : memref<2x2x4x128xf32, #tpu.memory_space<vmem>>, vector<1x2x4x128xf32>,
    %c1_33 = arith.constant 1 : index
    %c0_34 = arith.constant 0 : index
    %c0_35 = arith.constant 0 : index
    %c0_36 = arith.constant 0 : index
    %133 = vector.load %arg4[%c1_33, %c0_34, %c0_35, %c0_36] : memref<2x2x4x128xf32, #tpu.memory_space<vmem>>, vector<1x2x4x128xf32>
    %134 = vector.shape_cast %133 : vector<1x2x4x128xf32> to vector<2x4x128xf32>
    %135 = vector.shape_cast %129 : vector<2x4x128xf32> to vector<1x2x4x128xf32>
    tpu.vector_store %arg4[%c1_33, %c0_34, %c0_35, %c0_36], %135 {strides = array<i32>} : memref<2x2x4x128xf32, #tpu.memory_space<vmem>>, vector<1x2x4x128xf32>,
    return
  }
  func.func @transform_0(%arg0: i32, %arg1: i32) -> (i32, i32, i32, i32) {
    %c0_i32 = arith.constant 0 : i32
    %c0_i32_0 = arith.constant 0 : i32
    %c0_i32_1 = arith.constant 0 : i32
    return %c0_i32, %c0_i32_0, %arg1, %arg0 : i32, i32, i32, i32
  }
  func.func @transform_1(%arg0: i32, %arg1: i32) -> (i32, i32, i32, i32) {
    %c0_i32 = arith.constant 0 : i32
    %c0_i32_0 = arith.constant 0 : i32
    %c0_i32_1 = arith.constant 0 : i32
    %c0_i32_2 = arith.constant 0 : i32
    return %c0_i32, %c0_i32_0, %c0_i32_1, %arg0 : i32, i32, i32, i32
  }
  func.func @transform_2(%arg0: i32, %arg1: i32) -> (i32, i32, i32, i32) {
    %c0_i32 = arith.constant 0 : i32
    %c0_i32_0 = arith.constant 0 : i32
    %c0_i32_1 = arith.constant 0 : i32
    return %c0_i32, %arg1, %c0_i32_0, %arg0 : i32, i32, i32, i32
  }
}

</mosaic_0001>

<llo_original>
// kernel: tpu_custom_call.1
$region0: #{tpu_custom_call.1}
  #allocation0 [shape = 'u32[]', space=smem, size = 0x4, offset = 0x4, fixed_abs, tag = 'smem constant byte address 0x4 - core index']
  #allocation1 [shape = 'u32[144,128]{1,0:T(1,128)}', space=vmem, size = 0x12000, scoped, tag = 'internal scratch']
  %s0 = inlined_call_operand.hbm [shape: f32[4,2,2,128], index: 0, kind: input, shape index: {}]
  %s1 = inlined_call_operand.hbm [shape: f32[4,2,4,128], index: 1, kind: input, shape index: {}]
  %s2 = inlined_call_operand.hbm [shape: f32[2,2,4,128], index: 2, kind: output, shape index: {}]
  %s3 = sld [smem:[#allocation0]]
  $region26: #{tpu_custom_call.1} parent=0
    _
  %s5 = ssub.s32 1, %s3
  %s6 = scalar_select 0, %s5, %s3
  $region1: #{tpu_custom_call.1} parent=0
    #allocation2 [shape = 'u8[8192]{0}', space=vmem, size = 0x2000, scoped, tag = 'input window, operand 0, single buffered']
    #allocation3 [shape = 's32[1]{0}', space=sflag, size = 0x4, scoped, tag = 'scoped memory for tpu_custom_call.1']
    #allocation4 [shape = 's32[1]{0}', space=sflag, size = 0x4, scoped, tag = 'scoped memory for tpu_custom_call.1']
    #allocation5 [shape = 'u8[16384]{0}', space=vmem, size = 0x4000, scoped, tag = 'input window, operand 1, single buffered']
    #allocation6 [shape = 's32[1]{0}', space=sflag, size = 0x4, scoped, tag = 'scoped memory for tpu_custom_call.1']
    #allocation7 [shape = 'u8[8192]{0}', space=vmem, size = 0x2000, scoped, tag = 'output window, operand 0, single buffered']
    %7 = vsyncpa [#allocation3], 0
    %8 = vsyncpa [#allocation6], 0
    %9 = vsyncpa [#allocation4], 0
    // Predicated region
    $region2: #{tpu_custom_call.1} parent=1 // pred_check
      _
    $region3: #{tpu_custom_call.1} parent=1 // pred_check_branch
      %11 = sbr.rel (0) target = $region5
    $region4: #{tpu_custom_call.1} parent=1 // pred_region
      %s13 = ssub.s32 256, 256
      %14 = vsyncadd [#allocation3], %s13
      %s15 = sshll.u32 [#allocation2], 4
      %s16 = int_to_ptr.vmem [resolvable:$true] %s15
      %21 = dma.hbm_to_vmem [thread:$0]  %s0, 256, %s16, [#allocation3], 32, 32, 2
    $region5: #{tpu_custom_call.1} parent=1 // pred_fallthru
      _
    // Predicated region
    $region6: #{tpu_custom_call.1} parent=1 // pred_check
      _
    $region7: #{tpu_custom_call.1} parent=1 // pred_check_branch
      %23 = sbr.rel (0) target = $region9
    $region8: #{tpu_custom_call.1} parent=1 // pred_region
      %s25 = ssub.s32 512, 512
      %26 = vsyncadd [#allocation6], %s25
      %s27 = sshll.u32 [#allocation5], 4
      %s28 = int_to_ptr.vmem [resolvable:$true] %s27
      %33 = dma.hbm_to_vmem [thread:$0]  %s1, 512, %s28, [#allocation6], 64, 64, 4
    $region9: #{tpu_custom_call.1} parent=1 // pred_fallthru
      _
    // Predicated region
    $region10: #{tpu_custom_call.1} parent=1 // pred_check
      _
    $region11: #{tpu_custom_call.1} parent=1 // pred_check_branch
      %35 = sbr.rel (0) target = $region13
    $region12: #{tpu_custom_call.1} parent=1 // pred_region
      %36 = dma.done [#allocation3], 256
    $region13: #{tpu_custom_call.1} parent=1 // pred_fallthru
      _
    // Predicated region
    $region14: #{tpu_custom_call.1} parent=1 // pred_check
      _
    $region15: #{tpu_custom_call.1} parent=1 // pred_check_branch
      %38 = sbr.rel (0) target = $region17
    $region16: #{tpu_custom_call.1} parent=1 // pred_region
      %39 = dma.done [#allocation6], 512
    $region17: #{tpu_custom_call.1} parent=1 // pred_fallthru
      _
    %v40 = vld [vmem:[#allocation2] sm:$0x3]
    %v41 = vld [vmem:[#allocation2 + $0x2] sm:$0x3]
    %v42 = vld [vmem:[#allocation5] sm:$0xf]
    %v43 = vld [vmem:[#allocation5 + $0x4] sm:$0xf]
    %v46 = vunpack.c.l.s4 1966171168
    %v47 = vunpack.c.0.s8 %v46
    %v48 = vlaneseq
    %v49 = vshrl.u32 %v48, 7
    %v50 = vsub.s32 %v47, %v49
    %v51 = vrot.slane %v40, %v50
    %v52 = vcombine.high %v51, %v51
    %v54 = vunpack.c.l.s4 1966171168
    %v55 = vunpack.c.0.s8 %v54
    %v56 = vlaneseq
    %v57 = vshrl.u32 %v56, 7
    %v58 = vsub.s32 %v55, %v57
    %v59 = vrot.slane %v51, %v58
    %v61 = vunpack.c.l.s4 1966171168
    %v62 = vunpack.c.0.s8 %v61
    %v63 = vlaneseq
    %v64 = vshrl.u32 %v63, 7
    %v65 = vsub.s32 %v62, %v64
    %v66 = vrot.slane %v52, %v65
    %v69 = vunpack.c.l.s4 1966171168
    %v70 = vunpack.c.0.s8 %v69
    %v71 = vlaneseq
    %v72 = vshrl.u32 %v71, 7
    %v73 = vsub.s32 %v70, %v72
    %v74 = vrot.slane %v41, %v73
    %v75 = vcombine.high %v74, %v74
    %v77 = vunpack.c.l.s4 1966171168
    %v78 = vunpack.c.0.s8 %v77
    %v79 = vlaneseq
    %v80 = vshrl.u32 %v79, 7
    %v81 = vsub.s32 %v78, %v80
    %v82 = vrot.slane %v74, %v81
    %v84 = vunpack.c.l.s4 1966171168
    %v85 = vunpack.c.0.s8 %v84
    %v86 = vlaneseq
    %v87 = vshrl.u32 %v86, 7
    %v88 = vsub.s32 %v85, %v87
    %v89 = vrot.slane %v75, %v88
    %v90 = vlaneseq
    %v91 = vshrl.u32 %v90, 7
    %v92 = vsub.s32 0, %v91
    %v93 = vrot.slane %v59, %v92
    %v94 = vlaneseq
    %v95 = vshrl.u32 %v94, 7
    %v96 = vsub.s32 0, %v95
    %v97 = vrot.slane %v66, %v96
    %v100 = vmul.f32 %v93, %v42
    %v101 = vmul.f32 %v97, %v42
    %v102 = vadd.f32 %v100, 0.0
    %v103 = vadd.f32 %v101, 0.0
    %v104 = vlaneseq
    %v105 = vshrl.u32 %v104, 7
    %v106 = vsub.s32 0, %v105
    %v107 = vrot.slane %v82, %v106
    %v108 = vlaneseq
    %v109 = vshrl.u32 %v108, 7
    %v110 = vsub.s32 0, %v109
    %v111 = vrot.slane %v89, %v110
    %v114 = vmul.f32 %v107, %v43
    %v115 = vmul.f32 %v111, %v43
    %v116 = vsub.f32 %v102, %v114
    %v117 = vsub.f32 %v103, %v115
    %v118 = vmul.f32 %v93, %v43
    %v119 = vmul.f32 %v97, %v43
    %v120 = vadd.f32 %v118, 0.0
    %v121 = vadd.f32 %v119, 0.0
    %v122 = vmul.f32 %v107, %v42
    %v123 = vmul.f32 %v111, %v42
    %v124 = vadd.f32 %v120, %v122
    %v125 = vadd.f32 %v121, %v123
    %s126 = scalar_lea.vmem [#allocation2], 4
    %v127 = vld [vmem:[%s126] sm:$0x3]
    %v128 = vld [vmem:[%s126 + $0x2] sm:$0x3]
    %s129 = scalar_lea.vmem [#allocation5], 8
    %v130 = vld [vmem:[%s129] sm:$0xf]
    %v131 = vld [vmem:[%s129 + $0x4] sm:$0xf]
    %v134 = vunpack.c.l.s4 1966171168
    %v135 = vunpack.c.0.s8 %v134
    %v136 = vlaneseq
    %v137 = vshrl.u32 %v136, 7
    %v138 = vsub.s32 %v135, %v137
    %v139 = vrot.slane %v127, %v138
    %v140 = vcombine.high %v139, %v139
    %v142 = vunpack.c.l.s4 1966171168
    %v143 = vunpack.c.0.s8 %v142
    %v144 = vlaneseq
    %v145 = vshrl.u32 %v144, 7
    %v146 = vsub.s32 %v143, %v145
    %v147 = vrot.slane %v139, %v146
    %v149 = vunpack.c.l.s4 1966171168
    %v150 = vunpack.c.0.s8 %v149
    %v151 = vlaneseq
    %v152 = vshrl.u32 %v151, 7
    %v153 = vsub.s32 %v150, %v152
    %v154 = vrot.slane %v140, %v153
    %v157 = vunpack.c.l.s4 1966171168
    %v158 = vunpack.c.0.s8 %v157
    %v159 = vlaneseq
    %v160 = vshrl.u32 %v159, 7
    %v161 = vsub.s32 %v158, %v160
    %v162 = vrot.slane %v128, %v161
    %v163 = vcombine.high %v162, %v162
    %v165 = vunpack.c.l.s4 1966171168
    %v166 = vunpack.c.0.s8 %v165
    %v167 = vlaneseq
    %v168 = vshrl.u32 %v167, 7
    %v169 = vsub.s32 %v166, %v168
    %v170 = vrot.slane %v162, %v169
    %v172 = vunpack.c.l.s4 1966171168
    %v173 = vunpack.c.0.s8 %v172
    %v174 = vlaneseq
    %v175 = vshrl.u32 %v174, 7
    %v176 = vsub.s32 %v173, %v175
    %v177 = vrot.slane %v163, %v176
    %v178 = vlaneseq
    %v179 = vshrl.u32 %v178, 7
    %v180 = vsub.s32 0, %v179
    %v181 = vrot.slane %v147, %v180
    %v182 = vlaneseq
    %v183 = vshrl.u32 %v182, 7
    %v184 = vsub.s32 0, %v183
    %v185 = vrot.slane %v154, %v184
    %v188 = vmul.f32 %v181, %v130
    %v189 = vmul.f32 %v185, %v130
    %v190 = vadd.f32 %v116, %v188
    %v191 = vadd.f32 %v117, %v189
    %v192 = vlaneseq
    %v193 = vshrl.u32 %v192, 7
    %v194 = vsub.s32 0, %v193
    %v195 = vrot.slane %v170, %v194
    %v196 = vlaneseq
    %v197 = vshrl.u32 %v196, 7
    %v198 = vsub.s32 0, %v197
    %v199 = vrot.slane %v177, %v198
    %v202 = vmul.f32 %v195, %v131
    %v203 = vmul.f32 %v199, %v131
    %v204 = vsub.f32 %v190, %v202
    %v205 = vsub.f32 %v191, %v203
    %v206 = vmul.f32 %v181, %v131
    %v207 = vmul.f32 %v185, %v131
    %v208 = vadd.f32 %v124, %v206
    %v209 = vadd.f32 %v125, %v207
    %v210 = vmul.f32 %v195, %v130
    %v211 = vmul.f32 %v199, %v130
    %v212 = vadd.f32 %v208, %v210
    %v213 = vadd.f32 %v209, %v211
    %s214 = scalar_lea.vmem [#allocation2], 8
    %v215 = vld [vmem:[%s214] sm:$0x3]
    %v216 = vld [vmem:[%s214 + $0x2] sm:$0x3]
    %s217 = scalar_lea.vmem [#allocation5], 16
    %v218 = vld [vmem:[%s217] sm:$0xf]
    %v219 = vld [vmem:[%s217 + $0x4] sm:$0xf]
    %v222 = vunpack.c.l.s4 1966171168
    %v223 = vunpack.c.0.s8 %v222
    %v224 = vlaneseq
    %v225 = vshrl.u32 %v224, 7
    %v226 = vsub.s32 %v223, %v225
    %v227 = vrot.slane %v215, %v226
    %v228 = vcombine.high %v227, %v227
    %v230 = vunpack.c.l.s4 1966171168
    %v231 = vunpack.c.0.s8 %v230
    %v232 = vlaneseq
    %v233 = vshrl.u32 %v232, 7
    %v234 = vsub.s32 %v231, %v233
    %v235 = vrot.slane %v227, %v234
    %v237 = vunpack.c.l.s4 1966171168
    %v238 = vunpack.c.0.s8 %v237
    %v239 = vlaneseq
    %v240 = vshrl.u32 %v239, 7
    %v241 = vsub.s32 %v238, %v240
    %v242 = vrot.slane %v228, %v241
    %v245 = vunpack.c.l.s4 1966171168
    %v246 = vunpack.c.0.s8 %v245
    %v247 = vlaneseq
    %v248 = vshrl.u32 %v247, 7
    %v249 = vsub.s32 %v246, %v248
    %v250 = vrot.slane %v216, %v249
    %v251 = vcombine.high %v250, %v250
    %v253 = vunpack.c.l.s4 1966171168
    %v254 = vunpack.c.0.s8 %v253
    %v255 = vlaneseq
    %v256 = vshrl.u32 %v255, 7
    %v257 = vsub.s32 %v254, %v256
    %v258 = vrot.slane %v250, %v257
    %v260 = vunpack.c.l.s4 1966171168
    %v261 = vunpack.c.0.s8 %v260
    %v262 = vlaneseq
    %v263 = vshrl.u32 %v262, 7
    %v264 = vsub.s32 %v261, %v263
    %v265 = vrot.slane %v251, %v264
    %v266 = vlaneseq
    %v267 = vshrl.u32 %v266, 7
    %v268 = vsub.s32 0, %v267
    %v269 = vrot.slane %v235, %v268
    %v270 = vlaneseq
    %v271 = vshrl.u32 %v270, 7
    %v272 = vsub.s32 0, %v271
    %v273 = vrot.slane %v242, %v272
    %v276 = vmul.f32 %v269, %v218
    %v277 = vmul.f32 %v273, %v218
    %v278 = vadd.f32 %v204, %v276
    %v279 = vadd.f32 %v205, %v277
    %v280 = vlaneseq
    %v281 = vshrl.u32 %v280, 7
    %v282 = vsub.s32 0, %v281
    %v283 = vrot.slane %v258, %v282
    %v284 = vlaneseq
    %v285 = vshrl.u32 %v284, 7
    %v286 = vsub.s32 0, %v285
    %v287 = vrot.slane %v265, %v286
    %v290 = vmul.f32 %v283, %v219
    %v291 = vmul.f32 %v287, %v219
    %v292 = vsub.f32 %v278, %v290
    %v293 = vsub.f32 %v279, %v291
    %v294 = vmul.f32 %v269, %v219
    %v295 = vmul.f32 %v273, %v219
    %v296 = vadd.f32 %v212, %v294
    %v297 = vadd.f32 %v213, %v295
    %v298 = vmul.f32 %v283, %v218
    %v299 = vmul.f32 %v287, %v218
    %v300 = vadd.f32 %v296, %v298
    %v301 = vadd.f32 %v297, %v299
    %s302 = scalar_lea.vmem [#allocation2], 12
    %v303 = vld [vmem:[%s302] sm:$0x3]
    %v304 = vld [vmem:[%s302 + $0x2] sm:$0x3]
    %s305 = scalar_lea.vmem [#allocation5], 24
    %v306 = vld [vmem:[%s305] sm:$0xf]
    %v307 = vld [vmem:[%s305 + $0x4] sm:$0xf]
    %v310 = vunpack.c.l.s4 1966171168
    %v311 = vunpack.c.0.s8 %v310
    %v312 = vlaneseq
    %v313 = vshrl.u32 %v312, 7
    %v314 = vsub.s32 %v311, %v313
    %v315 = vrot.slane %v303, %v314
    %v316 = vcombine.high %v315, %v315
    %v318 = vunpack.c.l.s4 1966171168
    %v319 = vunpack.c.0.s8 %v318
    %v320 = vlaneseq
    %v321 = vshrl.u32 %v320, 7
    %v322 = vsub.s32 %v319, %v321
    %v323 = vrot.slane %v315, %v322
    %v325 = vunpack.c.l.s4 1966171168
    %v326 = vunpack.c.0.s8 %v325
    %v327 = vlaneseq
    %v328 = vshrl.u32 %v327, 7
    %v329 = vsub.s32 %v326, %v328
    %v330 = vrot.slane %v316, %v329
    %v333 = vunpack.c.l.s4 1966171168
    %v334 = vunpack.c.0.s8 %v333
    %v335 = vlaneseq
    %v336 = vshrl.u32 %v335, 7
    %v337 = vsub.s32 %v334, %v336
    %v338 = vrot.slane %v304, %v337
    %v339 = vcombine.high %v338, %v338
    %v341 = vunpack.c.l.s4 1966171168
    %v342 = vunpack.c.0.s8 %v341
    %v343 = vlaneseq
    %v344 = vshrl.u32 %v343, 7
    %v345 = vsub.s32 %v342, %v344
    %v346 = vrot.slane %v338, %v345
    %v348 = vunpack.c.l.s4 1966171168
    %v349 = vunpack.c.0.s8 %v348
    %v350 = vlaneseq
    %v351 = vshrl.u32 %v350, 7
    %v352 = vsub.s32 %v349, %v351
    %v353 = vrot.slane %v339, %v352
    %v354 = vlaneseq
    %v355 = vshrl.u32 %v354, 7
    %v356 = vsub.s32 0, %v355
    %v357 = vrot.slane %v323, %v356
    %v358 = vlaneseq
    %v359 = vshrl.u32 %v358, 7
    %v360 = vsub.s32 0, %v359
    %v361 = vrot.slane %v330, %v360
    %v364 = vmul.f32 %v357, %v306
    %v365 = vmul.f32 %v361, %v306
    %v366 = vadd.f32 %v292, %v364
    %v367 = vadd.f32 %v293, %v365
    %v368 = vlaneseq
    %v369 = vshrl.u32 %v368, 7
    %v370 = vsub.s32 0, %v369
    %v371 = vrot.slane %v346, %v370
    %v372 = vlaneseq
    %v373 = vshrl.u32 %v372, 7
    %v374 = vsub.s32 0, %v373
    %v375 = vrot.slane %v353, %v374
    %v378 = vmul.f32 %v371, %v307
    %v379 = vmul.f32 %v375, %v307
    %v380 = vsub.f32 %v366, %v378
    %v381 = vsub.f32 %v367, %v379
    %v382 = vmul.f32 %v357, %v307
    %v383 = vmul.f32 %v361, %v307
    %v384 = vadd.f32 %v300, %v382
    %v385 = vadd.f32 %v301, %v383
    %v386 = vmul.f32 %v371, %v306
    %v387 = vmul.f32 %v375, %v306
    %v388 = vadd.f32 %v384, %v386
    %v389 = vadd.f32 %v385, %v387
    %390 = vst [vmem:[#allocation7] sm:$0xf] %v380
    %391 = vst [vmem:[#allocation7 + $0x4] sm:$0xf] %v381
    %s392 = scalar_lea.vmem [#allocation7], 8
    %393 = vst [vmem:[%s392] sm:$0xf] %v388
    %394 = vst [vmem:[%s392 + $0x4] sm:$0xf] %v389
    // Predicated region
    $region18: #{tpu_custom_call.1} parent=1 // pred_check
      _
    $region19: #{tpu_custom_call.1} parent=1 // pred_check_branch
      %396 = sbr.rel (0) target = $region21
    $region20: #{tpu_custom_call.1} parent=1 // pred_region
      %s398 = ssub.s32 256, 256
      %399 = vsyncadd [#allocation4], %s398
      %s400 = sshll.u32 [#allocation7], 4
      %s401 = int_to_ptr.vmem [resolvable:$true] %s400
      %406 = dma.vmem_to_hbm [thread:$0]  %s401, 256, %s2, [#allocation4], 64, 64, 4
    $region21: #{tpu_custom_call.1} parent=1 // pred_fallthru
      _
    // Predicated region
    $region22: #{tpu_custom_call.1} parent=1 // pred_check
      _
    $region23: #{tpu_custom_call.1} parent=1 // pred_check_branch
      %408 = sbr.rel (0) target = $region25
    $region24: #{tpu_custom_call.1} parent=1 // pred_region
      %409 = dma.done [#allocation4], 256
    $region25: #{tpu_custom_call.1} parent=1 // pred_fallthru
      _
    %410 = vsyncpa [#allocation3], 1
    %411 = vsyncpa [#allocation6], 1
    %412 = vsyncpa [#allocation4], 1

</llo_original>
